<compile_context>
chip_gen: v7x
topology: tpu7x:2x2x1
jax: 0.10.0
libtpu: 0.0.40
codegen_flags: <defaults>
</compile_context>

<pallas_src>
import functools

import jax
import jax.numpy as jnp
from jax import lax
from jax.experimental import pallas as pl
from jax.experimental.pallas import tpu as pltpu


def _self_attn_kernel(qf_ref, kf_ref, mhT_ref, wvoT_ref, out_ref, *,
                      bf16_softmax):
    """Fused self-attention for one batch element (one grid step).

    qf_ref:   (Cq, N)   query feats, channels on sublanes, N = H*W on lanes
    kf_ref:   (Ck, N)   key feats
    mhT_ref:  (Ck, Cq)  bf16, = scale * wk @ wq^T  (q/k projections + matmul_norm folded)
    wvoT_ref: (Co, Ck)  bf16, = (wv @ wo)^T        (value + out projections folded)
    out_ref:  (Co, N)   lane-dense output block
    """
    n = kf_ref.shape[1]
    co = out_ref.shape[0]

    xq = qf_ref[...].astype(jnp.bfloat16)            # (Cq, N)
    xk = kf_ref[...].astype(jnp.bfloat16)            # (Ck, N)

    # A = M^T @ Xq  (Ck, N); then simT = Xk^T @ A = (Xq^T M Xk)^T, i.e. sim^T
    # with shape (Nk, Nq). Contraction axis chosen via dimension_numbers so no
    # transpose is materialized. bf16 operands, f32 accumulation.
    a = jnp.dot(mhT_ref[...], xq, preferred_element_type=jnp.float32)   # (Ck, N)
    simT = lax.dot_general(
        xk, a.astype(jnp.bfloat16),
        dimension_numbers=(((0,), (0,)), ((), ())),
        preferred_element_type=jnp.float32)                             # (Nk, Nq)

    # Softmax over the key axis (axis 0); normalization deferred past p@v.
    m = jnp.max(simT, axis=0, keepdims=True)                            # (1, Nq)
    if bf16_softmax:
        # v6e/v7x: bf16 VALU/EUP — halve the N^2 elementwise/EUP traffic.
        e = jnp.exp((simT - m).astype(jnp.bfloat16))                    # (Nk, Nq) bf16
    else:
        # v5e/v4: no bf16 VALU/EUP — keep elementwise math in f32, cast only
        # the MXU operand.
        e = jnp.exp(simT - m).astype(jnp.bfloat16)

    # Value projection (out_project pre-folded).  A ones row is appended so the
    # same MXU pass also produces the softmax denominator (column sums of e),
    # accumulated in f32 even though e is bf16.
    vT = jnp.dot(wvoT_ref[...], xk, preferred_element_type=jnp.float32)  # (Co, N)
    vT_ext = jnp.concatenate(
        [vT.astype(jnp.bfloat16), jnp.ones((1, n), jnp.bfloat16)], axis=0)
    ctx_s = jnp.dot(vT_ext, e, preferred_element_type=jnp.float32)       # (Co+1, Nq)
    ctx = ctx_s[:co]                                                     # (Co, Nq)
    denom = ctx_s[co:co + 1]                                             # (1, Nq)
    out_ref[...] = (ctx * pl.reciprocal(denom, approx=True)).astype(out_ref.dtype)


def _bf16_softmax_ok():
    """Use the bf16 exp/softmax path only on generations with bf16 VALU/EUP."""
    try:
        kind = jax.devices()[0].device_kind.lower()
    except Exception:
        return False
    return ("v6" in kind) or ("v7" in kind)


def prepare_self_attention_weights(wq, wk, wv, wo, transform_channels):
    """One-time host-side weight algebra (hoisted out of the forward path).

    wq/wk/wv/wo are the (in, out) matrices of the bias-free 1x1 convs.
    Returns:
      mhT:  (Ck, Cq) bf16 — scale * wk @ wq^T (q/k projections + matmul_norm)
      wvoT: (Co, Ck) bf16 — (wv @ wo)^T        (value + out projections)
    """
    scale = float(transform_channels) ** (-0.5)
    mhT = (scale * (wk @ wq.T)).astype(jnp.bfloat16)
    wvoT = (wv @ wo).T.astype(jnp.bfloat16)
    return mhT, wvoT


def self_attention_block(query_feats, key_feats, mhT, wvoT, *,
                         bf16_softmax=None):
    """query_feats/key_feats: NCHW.  mhT/wvoT from prepare_self_attention_weights.
    Returns NCHW output (B, Co, H, W)."""
    B, Cq, H, W = query_feats.shape
    _, Ck, _, _ = key_feats.shape
    N = H * W
    Co = wvoT.shape[0]
    if bf16_softmax is None:
        bf16_softmax = _bf16_softmax_ok()

    # NCHW -> (B, C, N): pure reshape, no transpose/copy.
    qf = query_feats.reshape(B, Cq, N)
    kf = key_feats.reshape(B, Ck, N)

    kernel = functools.partial(_self_attn_kernel, bf16_softmax=bf16_softmax)

    out = pl.pallas_call(
        kernel,
        out_shape=jax.ShapeDtypeStruct((B, Co, N), query_feats.dtype),
        grid_spec=pltpu.PrefetchScalarGridSpec(
            num_scalar_prefetch=0,
            grid=(B,),
            in_specs=[
                pl.BlockSpec((None, Cq, N), lambda b: (b, 0, 0)),
                pl.BlockSpec((None, Ck, N), lambda b: (b, 0, 0)),
                pl.BlockSpec((Ck, Cq), lambda b: (0, 0)),
                pl.BlockSpec((Co, Ck), lambda b: (0, 0)),
            ],
            out_specs=pl.BlockSpec((None, Co, N), lambda b: (b, 0, 0)),
        ),
        compiler_params=pltpu.CompilerParams(
            dimension_semantics=("parallel",)),
    )(qf, kf, mhT, wvoT)

    # (B, Co, N) is already NCHW up to a reshape (no transpose needed).
    return out.reshape(B, Co, H, W)
    # TODO(synk): for much larger H*W the dense (N, N) sim/e working set
    # (~6*N^2 bytes with bf16 e) stops fitting scoped VMEM — on v7x (64 MiB,
    # 32 MiB scoped) around N~2-3k, ~2x later on v5e/v6e (raise
    # vmem_limit_bytes first there); beyond that switch to a KV-tiled
    # online-softmax (flash) formulation.


def _reference(query_feats, key_feats, wq, wk, wv, wo, T):
    """Pure-JAX f32 reference mirroring the PyTorch forward exactly."""
    B, Cq, H, W = query_feats.shape
    _, Ck, _, _ = key_feats.shape
    N = H * W
    qf = query_feats.reshape(B, Cq, N).transpose(0, 2, 1)   # (B, N, Cq)
    kf = key_feats.reshape(B, Ck, N).transpose(0, 2, 1)     # (B, N, Ck)
    q = jnp.einsum('bnc,ct->bnt', qf, wq)
    k = jnp.einsum('bnc,ct->bnt', kf, wk)
    v = jnp.einsum('bnc,ct->bnt', kf, wv)
    sim = jnp.einsum('bqt,bkt->bqk', q, k) * (float(T) ** -0.5)
    sim = jax.nn.softmax(sim, axis=-1)
    ctx = jnp.einsum('bqk,bkt->bqt', sim, v)
    out = jnp.einsum('bnt,to->bno', ctx, wo)
    return out.transpose(0, 2, 1).reshape(B, wo.shape[1], H, W)


if __name__ == "__main__":
    # Module hyper-params
    key_in_channels = 16
    query_in_channels = 16
    transform_channels = 32
    out_channels = 16
    B, H, W = 2, 16, 16

    key = jax.random.PRNGKey(0)
    k_qx, k_kx, k_wq, k_wk, k_wv, k_wo = jax.random.split(key, 6)

    query_feats = jax.random.normal(
        k_qx, (B, query_in_channels, H, W), dtype=jnp.float32)
    key_feats = jax.random.normal(
        k_kx, (B, key_in_channels, H, W), dtype=jnp.float32)

    # 1x1-conv weights. PyTorch Conv2d weight is (out, in, 1, 1); we store the
    # equivalent (in, out) matrices (deterministic synthetic init). The spec's
    # non-norm projection branch uses bias=False, so there are no biases to fold.
    def init_w(rng, cin, cout):
        return jax.random.normal(rng, (cin, cout), dtype=jnp.float32) * (
            1.0 / jnp.sqrt(cin))

    wq = init_w(k_wq, query_in_channels, transform_channels)
    wk = init_w(k_wk, key_in_channels, transform_channels)
    wv = init_w(k_wv, key_in_channels, transform_channels)
    wo = init_w(k_wo, transform_channels, out_channels)

    # One-time weight preparation (hoisted out of the per-forward path).
    mhT, wvoT = prepare_self_attention_weights(wq, wk, wv, wo,
                                               transform_channels)
    mhT, wvoT = jax.block_until_ready((mhT, wvoT))

    out = self_attention_block(query_feats, key_feats, mhT, wvoT)
    out = jax.block_until_ready(out)

    ref = _reference(query_feats, key_feats, wq, wk, wv, wo,
                     transform_channels)
    assert out.shape == (B, out_channels, H, W)
    # bf16 MXU operands / bf16 folded weights / approx reciprocal -> loosened
    # tolerance vs. a pure-f32 implementation.
    assert jnp.allclose(out, ref, rtol=5e-2, atol=5e-2)

    print("KERNEL_OK")
</pallas_src>

<mosaic_0001>
module attributes {stable_mosaic.version = 11 : i64} {
  func.func @_self_attn_kernel(%arg0: i32, %arg1: memref<1x16x256xf32, #tpu.memory_space<vmem>>, %arg2: memref<1x16x256xf32, #tpu.memory_space<vmem>>, %arg3: memref<16x16xbf16, #tpu.memory_space<vmem>>, %arg4: memref<16x16xbf16, #tpu.memory_space<vmem>>, %arg5: memref<1x16x256xf32, #tpu.memory_space<vmem>>) attributes {dimension_semantics = [#tpu.dimension_semantics<parallel>], iteration_bounds = array<i64: 2>, scalar_prefetch = 0 : i64, scratch_operands = 0 : i64, tpu.core_type = #tpu.core_type<tc>, window_params = [{transform_indices = @transform_0, window_bounds = array<i64: 1, 16, 256>}, {transform_indices = @transform_1, window_bounds = array<i64: 1, 16, 256>}, {pipeline_mode = #tpu.pipeline_mode<synchronous>, transform_indices = @transform_2, window_bounds = array<i64: 16, 16>}, {pipeline_mode = #tpu.pipeline_mode<synchronous>, transform_indices = @transform_3, window_bounds = array<i64: 16, 16>}, {transform_indices = @transform_4, window_bounds = array<i64: 1, 16, 256>}]} {
    %c0 = arith.constant 0 : index
    %c0_0 = arith.constant 0 : index
    %c0_1 = arith.constant 0 : index
    %0 = vector.load %arg1[%c0, %c0_0, %c0_1] : memref<1x16x256xf32, #tpu.memory_space<vmem>>, vector<1x16x256xf32>
    %1 = vector.shape_cast %0 : vector<1x16x256xf32> to vector<16x256xf32>
    %2 = arith.truncf %1 : vector<16x256xf32> to vector<16x256xbf16>
    %c0_2 = arith.constant 0 : index
    %c0_3 = arith.constant 0 : index
    %c0_4 = arith.constant 0 : index
    %3 = vector.load %arg2[%c0_2, %c0_3, %c0_4] : memref<1x16x256xf32, #tpu.memory_space<vmem>>, vector<1x16x256xf32>
    %4 = vector.shape_cast %3 : vector<1x16x256xf32> to vector<16x256xf32>
    %5 = arith.truncf %4 : vector<16x256xf32> to vector<16x256xbf16>
    %c0_5 = arith.constant 0 : index
    %c0_6 = arith.constant 0 : index
    %6 = vector.load %arg3[%c0_5, %c0_6] : memref<16x16xbf16, #tpu.memory_space<vmem>>, vector<16x16xbf16>
    %cst = arith.constant dense<0.000000e+00> : vector<16x256xf32>
    %7 = tpu.matmul %6, %2, %cst {dimension_numbers = #tpu.dot_dimension_numbers<[1], [0], [0], [1], [0, 0, 1, 1], [], []>} : vector<16x16xbf16>, vector<16x256xbf16>, vector<16x256xf32> -> vector<16x256xf32>
    %8 = arith.truncf %7 : vector<16x256xf32> to vector<16x256xbf16>
    %cst_7 = arith.constant dense<0.000000e+00> : vector<256x256xf32>
    %9 = tpu.matmul %5, %8, %cst_7 {dimension_numbers = #tpu.dot_dimension_numbers<[0], [0], [1], [1], [0, 1, 1, 1], [], []>} : vector<16x256xbf16>, vector<16x256xbf16>, vector<256x256xf32> -> vector<256x256xf32>
    %cst_8 = arith.constant dense<0xFF800000> : vector<256xf32>
    %10 = vector.multi_reduction <maximumf>, %9, %cst_8 [0] : vector<256x256xf32> to vector<256xf32>
    %11 = vector.shape_cast %10 : vector<256xf32> to vector<1x256xf32>
    %12 = vector.broadcast %11 : vector<1x256xf32> to vector<256x256xf32>
    %13 = arith.subf %9, %12 : vector<256x256xf32>
    %14 = math.exp %13 : vector<256x256xf32>
    %15 = arith.truncf %14 : vector<256x256xf32> to vector<256x256xbf16>
    %c0_9 = arith.constant 0 : index
    %c0_10 = arith.constant 0 : index
    %16 = vector.load %arg4[%c0_9, %c0_10] : memref<16x16xbf16, #tpu.memory_space<vmem>>, vector<16x16xbf16>
    %cst_11 = arith.constant dense<0.000000e+00> : vector<16x256xf32>
    %17 = tpu.matmul %16, %5, %cst_11 {dimension_numbers = #tpu.dot_dimension_numbers<[1], [0], [0], [1], [0, 0, 1, 1], [], []>} : vector<16x16xbf16>, vector<16x256xbf16>, vector<16x256xf32> -> vector<16x256xf32>
    %18 = arith.truncf %17 : vector<16x256xf32> to vector<16x256xbf16>
    %cst_12 = arith.constant 1.000000e+00 : bf16
    %19 = vector.broadcast %cst_12 : bf16 to vector<1x256xbf16>
    %20 = tpu.concatenate %18, %19 in 0 : vector<16x256xbf16>, vector<1x256xbf16> -> vector<17x256xbf16>
    %cst_13 = arith.constant dense<0.000000e+00> : vector<17x256xf32>
    %21 = tpu.matmul %20, %15, %cst_13 {dimension_numbers = #tpu.dot_dimension_numbers<[1], [0], [0], [1], [0, 0, 1, 1], [], []>} : vector<17x256xbf16>, vector<256x256xbf16>, vector<17x256xf32> -> vector<17x256xf32>
    %22 = vector.extract_strided_slice %21 {offsets = [0, 0], sizes = [16, 256], strides = [1, 1]} : vector<17x256xf32> to vector<16x256xf32>
    %23 = vector.extract_strided_slice %21 {offsets = [16, 0], sizes = [1, 256], strides = [1, 1]} : vector<17x256xf32> to vector<1x256xf32>
    %24 = tpu.reciprocal %23 {approx = true} : vector<1x256xf32> -> vector<1x256xf32>
    %25 = vector.broadcast %24 : vector<1x256xf32> to vector<16x256xf32>
    %26 = arith.mulf %22, %25 : vector<16x256xf32>
    %c0_14 = arith.constant 0 : index
    %c0_15 = arith.constant 0 : index
    %c0_16 = arith.constant 0 : index
    %27 = vector.load %arg5[%c0_14, %c0_15, %c0_16] : memref<1x16x256xf32, #tpu.memory_space<vmem>>, vector<1x16x256xf32>
    %28 = vector.shape_cast %27 : vector<1x16x256xf32> to vector<16x256xf32>
    %29 = vector.shape_cast %26 : vector<16x256xf32> to vector<1x16x256xf32>
    tpu.vector_store %arg5[%c0_14, %c0_15, %c0_16], %29 {strides = array<i32>} : memref<1x16x256xf32, #tpu.memory_space<vmem>>, vector<1x16x256xf32>,
    return
  }
  func.func @transform_0(%arg0: i32) -> (i32, i32, i32) {
    %c0_i32 = arith.constant 0 : i32
    %c0_i32_0 = arith.constant 0 : i32
    %c0_i32_1 = arith.constant 0 : i32
    return %arg0, %c0_i32, %c0_i32_0 : i32, i32, i32
  }
  func.func @transform_1(%arg0: i32) -> (i32, i32, i32) {
    %c0_i32 = arith.constant 0 : i32
    %c0_i32_0 = arith.constant 0 : i32
    %c0_i32_1 = arith.constant 0 : i32
    return %arg0, %c0_i32, %c0_i32_0 : i32, i32, i32
  }
  func.func @transform_2(%arg0: i32) -> (i32, i32) {
    %c0_i32 = arith.constant 0 : i32
    %c0_i32_0 = arith.constant 0 : i32
    %c0_i32_1 = arith.constant 0 : i32
    return %c0_i32, %c0_i32_0 : i32, i32
  }
  func.func @transform_3(%arg0: i32) -> (i32, i32) {
    %c0_i32 = arith.constant 0 : i32
    %c0_i32_0 = arith.constant 0 : i32
    %c0_i32_1 = arith.constant 0 : i32
    return %c0_i32, %c0_i32_0 : i32, i32
  }
  func.func @transform_4(%arg0: i32) -> (i32, i32, i32) {
    %c0_i32 = arith.constant 0 : i32
    %c0_i32_0 = arith.constant 0 : i32
    %c0_i32_1 = arith.constant 0 : i32
    return %arg0, %c0_i32, %c0_i32_0 : i32, i32, i32
  }
}

</mosaic_0001>

<llo_original>
// kernel: tpu_custom_call.1
$region0: #{tpu_custom_call.1}
  #allocation0 [shape = 'u32[]', space=smem, size = 0x4, offset = 0x4, fixed_abs, tag = 'smem constant byte address 0x4 - core index']
  #allocation1 [shape = 'u32[144,128]{1,0:T(1,128)}', space=vmem, size = 0x12000, scoped, tag = 'internal scratch']
  %s0 = inlined_call_operand.hbm [shape: f32[2,16,256], index: 0, kind: input, shape index: {}]
  %s1 = inlined_call_operand.hbm [shape: f32[2,16,256], index: 1, kind: input, shape index: {}]
  %s2 = inlined_call_operand.hbm [shape: bf16[16,16], index: 2, kind: input, shape index: {}]
  %s3 = inlined_call_operand.vmem [shape: bf16[16,16], index: 3, kind: input, shape index: {}]
  %s4 = inlined_call_operand.hbm [shape: f32[2,16,256], index: 4, kind: output, shape index: {}]
  %s5 = sld [smem:[#allocation0]]
  $region61: #{tpu_custom_call.1} parent=0
    _
  %s7 = ssub.s32 1, %s5
  %s8 = scalar_select 0, %s7, %s5
  $region1: #{tpu_custom_call.1} parent=0
    #allocation2 [shape = 'u8[32768]{0}', space=vmem, size = 0x8000, scoped, tag = 'input window, operand 0']
    #allocation3 [shape = 's32[2]{0}', space=sflag, size = 0x8, scoped, tag = 'scoped memory for tpu_custom_call.1']
    #allocation4 [shape = 's32[2]{0}', space=sflag, size = 0x8, scoped, tag = 'scoped memory for tpu_custom_call.1']
    #allocation5 [shape = 'u8[32768]{0}', space=vmem, size = 0x8000, scoped, tag = 'input window, operand 1']
    #allocation6 [shape = 's32[2]{0}', space=sflag, size = 0x8, scoped, tag = 'scoped memory for tpu_custom_call.1']
    #allocation7 [shape = 'u8[4096]{0}', space=vmem, size = 0x1000, scoped, tag = 'input window, operand 2, single buffered']
    #allocation8 [shape = 'u8[32768]{0}', space=vmem, size = 0x8000, scoped, tag = 'output window, operand 0']
    %9 = vsyncpa [#allocation3], 0
    %s10 = scalar_lea.sflag [#allocation3], 1
    %11 = vsyncpa %s10, 0
    %12 = vsyncpa [#allocation6], 0
    %s13 = scalar_lea.sflag [#allocation6], 1
    %14 = vsyncpa %s13, 0
    %15 = vsyncpa [#allocation4], 0
    %s16 = scalar_lea.sflag [#allocation4], 1
    %17 = vsyncpa %s16, 0
    loop: start=0, step=1, limit=4
    $region2: #{tpu_custom_call.1} parent=1 // loop_pre_header
      _
    $region3: #{tpu_custom_call.1} parent=1 // loop_header
      %s19 = sphi 0, %s23
      %p20 = scmp.ge.s32.totalorder %s19, 4
      %s29 = sphi 0, %s31
      %s32 = sphi 0, %s29
      %s33 = sphi 0, %s32
      %s49 = sphi 0, %s33
      %s55 = sphi 0, %s57
      %s58 = sphi 0, %s55
      %s59 = sphi 0, %s58
      %s75 = sphi 0, %s59
      %s79 = sphi 0, %s79
      %s81 = sphi 0, %s79
      %s82 = sphi 0, %s81
      %s96 = sphi 0, %s82
      %s100 = sphi 0, %s100
      %s102 = sphi 0, %s100
      %s103 = sphi 0, %s102
      %s117 = sphi 0, %s103
      %s123 = sphi 0, %s125
      %s126 = sphi 0, %s123
      %s127 = sphi 0, %s126
      %s143 = sphi 0, %s127
    $region4: #{tpu_custom_call.1} parent=1 // loop_header_branch
      %22 = sbr.rel (%p20) target = $region8
    $region5: #{tpu_custom_call.1} parent=1 // loop_body
      %s24 = ssub.s32 %s19, 1
      %s25 = ssub.s32 %s19, 2
      %s26 = sadd.s32 %s19, 1
      %s27 = ssub.s32 %s19, %s26
      %p28 = scmp.eq.s32.totalorder %s27, 0
      %s30 = sadd.s32 %s29, 1
      %s31 = scalar_select %p28, %s29, %s30
      %p34 = pneg %p28
      %p35 = scmp.eq.s32.totalorder %s19, 1
      %p36 = por %p34, %p35
      %p37 = scmp.ne.s32.totalorder %s29, %s32
      %p38 = scmp.eq.s32.totalorder %s19, 0
      %p39 = por %p37, %p38
      %p40 = scmp.ne.s32.totalorder %s29, %s32
      %p41 = scmp.eq.s32.totalorder %s24, 1
      %p42 = por %p40, %p41
      %p43 = scmp.ne.s32.totalorder %s32, %s33
      %p44 = scmp.eq.s32.totalorder %s24, 0
      %p45 = por %p43, %p44
      %p46 = scmp.ne.s32.totalorder %s32, %s33
      %p47 = scmp.eq.s32.totalorder %s25, 1
      %p48 = por %p46, %p47
      %p50 = scmp.ne.s32.totalorder %s33, %s49
      %p51 = scmp.eq.s32.totalorder %s25, 0
      %p52 = por %p50, %p51
      %s53 = ssub.s32 %s19, %s26
      %p54 = scmp.eq.s32.totalorder %s53, 0
      %s56 = sadd.s32 %s55, 1
      %s57 = scalar_select %p54, %s55, %s56
      %p60 = pneg %p54
      %p61 = scmp.eq.s32.totalorder %s19, 1
      %p62 = por %p60, %p61
      %p63 = scmp.ne.s32.totalorder %s55, %s58
      %p64 = scmp.eq.s32.totalorder %s19, 0
      %p65 = por %p63, %p64
      %p66 = scmp.ne.s32.totalorder %s55, %s58
      %p67 = scmp.eq.s32.totalorder %s24, 1
      %p68 = por %p66, %p67
      %p69 = scmp.ne.s32.totalorder %s58, %s59
      %p70 = scmp.eq.s32.totalorder %s24, 0
      %p71 = por %p69, %p70
      %p72 = scmp.ne.s32.totalorder %s58, %s59
      %p73 = scmp.eq.s32.totalorder %s25, 1
      %p74 = por %p72, %p73
      %p76 = scmp.ne.s32.totalorder %s59, %s75
      %p77 = scmp.eq.s32.totalorder %s25, 0
      %p78 = por %p76, %p77
      %s80 = sadd.s32 %s79, 1
      %p83 = scmp.eq.s32.totalorder %s19, 1
      %p84 = scmp.ne.s32.totalorder %s79, %s81
      %p85 = scmp.eq.s32.totalorder %s19, 0
      %p86 = por %p84, %p85
      %p87 = scmp.ne.s32.totalorder %s79, %s81
      %p88 = scmp.eq.s32.totalorder %s24, 1
      %p89 = por %p87, %p88
      %p90 = scmp.ne.s32.totalorder %s81, %s82
      %p91 = scmp.eq.s32.totalorder %s24, 0
      %p92 = por %p90, %p91
      %p93 = scmp.ne.s32.totalorder %s81, %s82
      %p94 = scmp.eq.s32.totalorder %s25, 1
      %p95 = por %p93, %p94
      %p97 = scmp.ne.s32.totalorder %s82, %s96
      %p98 = scmp.eq.s32.totalorder %s25, 0
      %p99 = por %p97, %p98
      %s101 = sadd.s32 %s100, 1
      %p104 = scmp.eq.s32.totalorder %s19, 1
      %p105 = scmp.ne.s32.totalorder %s100, %s102
      %p106 = scmp.eq.s32.totalorder %s19, 0
      %p107 = por %p105, %p106
      %p108 = scmp.ne.s32.totalorder %s100, %s102
      %p109 = scmp.eq.s32.totalorder %s24, 1
      %p110 = por %p108, %p109
      %p111 = scmp.ne.s32.totalorder %s102, %s103
      %p112 = scmp.eq.s32.totalorder %s24, 0
      %p113 = por %p111, %p112
      %p114 = scmp.ne.s32.totalorder %s102, %s103
      %p115 = scmp.eq.s32.totalorder %s25, 1
      %p116 = por %p114, %p115
      %p118 = scmp.ne.s32.totalorder %s103, %s117
      %p119 = scmp.eq.s32.totalorder %s25, 0
      %p120 = por %p118, %p119
      %s121 = ssub.s32 %s19, %s26
      %p122 = scmp.eq.s32.totalorder %s121, 0
      %s124 = sadd.s32 %s123, 1
      %s125 = scalar_select %p122, %s123, %s124
      %p128 = pneg %p122
      %p129 = scmp.eq.s32.totalorder %s19, 1
      %p130 = por %p128, %p129
      %p131 = scmp.ne.s32.totalorder %s123, %s126
      %p132 = scmp.eq.s32.totalorder %s19, 0
      %p133 = por %p131, %p132
      %p134 = scmp.ne.s32.totalorder %s123, %s126
      %p135 = scmp.eq.s32.totalorder %s24, 1
      %p136 = por %p134, %p135
      %p137 = scmp.ne.s32.totalorder %s126, %s127
      %p138 = scmp.eq.s32.totalorder %s24, 0
      %p139 = por %p137, %p138
      %p140 = scmp.ne.s32.totalorder %s126, %s127
      %p141 = scmp.eq.s32.totalorder %s25, 1
      %p142 = por %p140, %p141
      %p144 = scmp.ne.s32.totalorder %s127, %s143
      %p145 = scmp.eq.s32.totalorder %s25, 0
      %p146 = por %p144, %p145
      %p147 = scmp.le.s32.totalorder 1, %s19
      %p148 = scmp.lt.s32.totalorder %s19, 3
      %p149 = pnand %p147, %p148
      %p150 = pneg %p149
      // Predicated region
      $region9: #{tpu_custom_call.1} parent=5 // pred_check
        _
      $region10: #{tpu_custom_call.1} parent=5 // pred_check_branch
        %152 = sbr.rel (%p149) target = $region12
      $region11: #{tpu_custom_call.1} parent=5 // pred_region
        %s153 = ssub.s32 %s19, 1
        // Predicated region
        $region13: #{tpu_custom_call.1} parent=11 // pred_check
          %p154 = pneg %p92
        $region14: #{tpu_custom_call.1} parent=11 // pred_check_branch
          %156 = sbr.rel (%p154) target = $region16
        $region15: #{tpu_custom_call.1} parent=11 // pred_region
          %s158 = ssub.s32 128, 128
          %159 = vsyncadd [#allocation6], %s158
          %s160 = sshll.u32 [#allocation7], 4
          %s161 = int_to_ptr.vmem [resolvable:$true] %s160
          %166 = dma.hbm_to_vmem [thread:$0]  %s2, 128, %s161, [#allocation6], 64, 64, 4
        $region16: #{tpu_custom_call.1} parent=11 // pred_fallthru
          _
        // Predicated region
        $region17: #{tpu_custom_call.1} parent=11 // pred_check
          %p167 = pneg %p113
        $region18: #{tpu_custom_call.1} parent=11 // pred_check_branch
          %169 = sbr.rel (%p167) target = $region20
        $region19: #{tpu_custom_call.1} parent=11 // pred_region
          _
        $region20: #{tpu_custom_call.1} parent=11 // pred_fallthru
          _
      $region12: #{tpu_custom_call.1} parent=5 // pred_fallthru
        _
      %p170 = scmp.lt.s32.totalorder %s19, 2
      // Predicated region
      $region21: #{tpu_custom_call.1} parent=5 // pred_check
        %p171 = pneg %p170
      $region22: #{tpu_custom_call.1} parent=5 // pred_check_branch
        %173 = sbr.rel (%p171) target = $region24
      $region23: #{tpu_custom_call.1} parent=5 // pred_region
        // Predicated region
        $region25: #{tpu_custom_call.1} parent=23 // pred_check
          %p174 = pneg %p39
        $region26: #{tpu_custom_call.1} parent=23 // pred_check_branch
          %176 = sbr.rel (%p174) target = $region28
        $region27: #{tpu_custom_call.1} parent=23 // pred_region
          %s177 = sand.u32 %s29, 1
          %s178 = scalar_lea.sflag [#allocation3], %s177
          %s179 = sand.u32 %s29, 1
          %s180 = smul.addr %s179, 32
          %s181 = scalar_lea.vmem [#allocation2], %s180
          %s183 = ssub.s32 512, 512
          %184 = vsyncadd %s178, %s183
          %s185 = smul.addr %s19, 4
          %s186 = smul.addr %s185, 128
          %s187 = scalar_lea.hbm %s0, %s186
          %s188 = sshll.u32 %s181, 4
          %s189 = int_to_ptr.vmem [resolvable:$true] %s188
          %194 = dma.hbm_to_vmem [thread:$0]  %s187, 512, %s189, %s178, 256, 256, 16
        $region28: #{tpu_custom_call.1} parent=23 // pred_fallthru
          _
        // Predicated region
        $region29: #{tpu_custom_call.1} parent=23 // pred_check
          %p195 = pneg %p65
        $region30: #{tpu_custom_call.1} parent=23 // pred_check_branch
          %197 = sbr.rel (%p195) target = $region32
        $region31: #{tpu_custom_call.1} parent=23 // pred_region
          %s198 = sand.u32 %s19, 1
          %s199 = scalar_lea.sflag [#allocation6], %s198
          %s200 = sand.u32 %s55, 1
          %s201 = smul.addr %s200, 32
          %s202 = scalar_lea.vmem [#allocation5], %s201
          %s204 = ssub.s32 512, 512
          %205 = vsyncadd %s199, %s204
          %s206 = smul.addr %s19, 4
          %s207 = smul.addr %s206, 128
          %s208 = scalar_lea.hbm %s1, %s207
          %s209 = sshll.u32 %s202, 4
          %s210 = int_to_ptr.vmem [resolvable:$true] %s209
          %215 = dma.hbm_to_vmem [thread:$0]  %s208, 512, %s210, %s199, 256, 256, 16
        $region32: #{tpu_custom_call.1} parent=23 // pred_fallthru
          _
      $region24: #{tpu_custom_call.1} parent=5 // pred_fallthru
        _
      %p216 = scmp.le.s32.totalorder 1, %s19
      %p217 = scmp.lt.s32.totalorder %s19, 3
      %p218 = pnand %p216, %p217
      %p219 = pneg %p218
      // Predicated region
      $region33: #{tpu_custom_call.1} parent=5 // pred_check
        _
      $region34: #{tpu_custom_call.1} parent=5 // pred_check_branch
        %221 = sbr.rel (%p218) target = $region36
      $region35: #{tpu_custom_call.1} parent=5 // pred_region
        %s222 = ssub.s32 %s19, 1
        %s223 = sand.u32 %s32, 1
        %s224 = scalar_lea.sflag [#allocation3], %s223
        %s225 = sand.u32 %s32, 1
        %s226 = smul.addr %s225, 32
        %s227 = scalar_lea.vmem [#allocation2], %s226
        // Predicated region
        $region37: #{tpu_custom_call.1} parent=35 // pred_check
          %p228 = pneg %p45
        $region38: #{tpu_custom_call.1} parent=35 // pred_check_branch
          %230 = sbr.rel (%p228) target = $region40
        $region39: #{tpu_custom_call.1} parent=35 // pred_region
          %231 = dma.done %s224, 512
        $region40: #{tpu_custom_call.1} parent=35 // pred_fallthru
          _
        %s232 = sand.u32 %s24, 1
        %s233 = scalar_lea.sflag [#allocation6], %s232
        %s234 = sand.u32 %s58, 1
        %s235 = smul.addr %s234, 32
        %s236 = scalar_lea.vmem [#allocation5], %s235
        // Predicated region
        $region41: #{tpu_custom_call.1} parent=35 // pred_check
          %p237 = pneg %p71
        $region42: #{tpu_custom_call.1} parent=35 // pred_check_branch
          %239 = sbr.rel (%p237) target = $region44
        $region43: #{tpu_custom_call.1} parent=35 // pred_region
          %240 = dma.done %s233, 512
        $region44: #{tpu_custom_call.1} parent=35 // pred_fallthru
          _
        // Predicated region
        $region45: #{tpu_custom_call.1} parent=35 // pred_check
          %p241 = pneg %p92
        $region46: #{tpu_custom_call.1} parent=35 // pred_check_branch
          %243 = sbr.rel (%p241) target = $region48
        $region47: #{tpu_custom_call.1} parent=35 // pred_region
          %244 = dma.done [#allocation6], 128
        $region48: #{tpu_custom_call.1} parent=35 // pred_fallthru
          _
        %s245 = sand.u32 %s32, 1
        %s246 = scalar_lea.sflag [#allocation3], %s245
        %s247 = sand.u32 %s32, 1
        %s248 = smul.addr %s247, 32
        %s249 = scalar_lea.vmem [#allocation2], %s248
        %p250 = pneg %p45
        %p251 = pneg %p42
        %s252 = sand.u32 %s24, 1
        %s253 = scalar_lea.sflag [#allocation6], %s252
        %s254 = sand.u32 %s58, 1
        %s255 = smul.addr %s254, 32
        %s256 = scalar_lea.vmem [#allocation5], %s255
        %p257 = pneg %p71
        %p258 = pneg %p68
        %p259 = pneg %p92
        %p260 = pneg %p89
        %p261 = pneg %p113
        %p262 = pneg %p110
        %p263 = pneg %p139
        %p264 = pneg %p136
        %s265 = sand.u32 %s126, 1
        %s266 = scalar_lea.sflag [#allocation4], %s265
        %s267 = sand.u32 %s126, 1
        %s268 = smul.addr %s267, 32
        %s269 = scalar_lea.vmem [#allocation8], %s268
        %v272 = vld [vmem:[%s227] sm:$0xff]
        %v273 = vld [vmem:[%s227 + $0x8] sm:$0xff]
        %v274 = vld [vmem:[%s227 + $0x10] sm:$0xff]
        %v275 = vld [vmem:[%s227 + $0x18] sm:$0xff]
        %v276 = vpack.c.bf16 %v274, %v272
        %v277 = vpack.c.bf16 %v275, %v273
        %v278 = vld [vmem:[%s236] sm:$0xff]
        %v279 = vld [vmem:[%s236 + $0x8] sm:$0xff]
        %v280 = vld [vmem:[%s236 + $0x10] sm:$0xff]
        %v281 = vld [vmem:[%s236 + $0x18] sm:$0xff]
        %v282 = vpack.c.bf16 %v280, %v278
        %v283 = vpack.c.bf16 %v281, %v279
        %v284 = vld [vmem:[#allocation7] sm:$0xf]
        %v285 = vld [vmem:[#allocation7 + $0x4] sm:$0xf]
        %v288 = vunpack.c.l.b16 %v284
        %v289 = vunpack.c.l.b16 %v285
        %v290 = vpack.c.b16 %v289, %v288
        %vm291 = vcmask 130048
        %v293 = vsel %vm291, %v290, 0
        %295 = vmatprep.subr.bf16.mxu0 %v277
        %296 = vmatpush1.bf16.msra.mxu0 %v276
        %297 = vmatprep.subr.bf16.mxu0 0
        %298 = vmatpush1.bf16.msra.mxu0 0
        %299 = vmatprep.subr.bf16.mxu0 0
        %300 = vmatpush1.bf16.msra.mxu0 0
        %301 = vmatprep.subr.bf16.mxu0 0
        %302 = vmatpush1.bf16.msra.mxu0 0
        %303 = vmatprep.subr.bf16.mxu0 0
        %304 = vmatpush1.bf16.msra.mxu0 0
        %305 = vmatprep.subr.bf16.mxu0 0
        %306 = vmatpush1.bf16.msra.mxu0 0
        %307 = vmatprep.subr.bf16.mxu0 0
        %308 = vmatpush1.bf16.msra.mxu0 0
        %309 = vmatprep.subr.bf16.mxu0 0
        %310 = vmatpush1.bf16.msra.mxu0 0
        %311 = vmatprep.subr.bf16.mxu0 0
        %312 = vmatpush1.bf16.msra.mxu0 0
        %313 = vmatprep.subr.bf16.mxu0 0
        %314 = vmatpush1.bf16.msra.mxu0 0
        %315 = vmatprep.subr.bf16.mxu0 0
        %316 = vmatpush1.bf16.msra.mxu0 0
        %317 = vmatprep.subr.bf16.mxu0 0
        %318 = vmatpush1.bf16.msra.mxu0 0
        %319 = vmatprep.subr.bf16.mxu0 0
        %320 = vmatpush1.bf16.msra.mxu0 0
        %321 = vmatprep.subr.bf16.mxu0 0
        %322 = vmatpush1.bf16.msra.mxu0 0
        %323 = vmatprep.subr.bf16.mxu0 0
        %324 = vmatpush1.bf16.msra.mxu0 0
        %325 = vmatprep.subr.bf16.mxu0 0
        %326 = vmatpush1.bf16.msra.mxu0 0
        %327 = vmatprep.mubr.bf16.mxu0 0
        %328 = vmatmul.mubr.bf16.gmra.mrb[0].mxu0 %v293
        %v329 = vpop.f32.mrb[0].mxu0
        %v330 = vadd.f32 0.0, %v329
        %v331 = vpop.f32.mrb[0].mxu0
        %v332 = vadd.f32 0.0, %v331
        %v333 = vpop.f32.mrb[0].mxu0
        %v334 = vadd.f32 0.0, %v333
        %v335 = vpop.f32.mrb[0].mxu0
        %v336 = vadd.f32 0.0, %v335
        %337 = vdwg.mxu0
        %v338 = vpack.c.bf16 %v334, %v330
        %v339 = vpack.c.bf16 %v336, %v332
        %340 = vxpose.xlu0.c.b16.start [1/8] %v282, 128
        %341 = vxpose.xlu0.c.b16.cont [2/8] 0, 128
        %342 = vxpose.xlu0.c.b16.cont [3/8] 0, 128
        %343 = vxpose.xlu0.c.b16.cont [4/8] 0, 128
        %344 = vxpose.xlu0.c.b16.cont [5/8] 0, 128
        %345 = vxpose.xlu0.c.b16.cont [6/8] 0, 128
        %346 = vxpose.xlu0.c.b16.cont [7/8] 0, 128
        %347 = vxpose.xlu0.c.b16.end [8/8] 0, 128
        %v348 = vpop.trf.xlu0
        %v349 = vpop.trf.xlu0
        %v350 = vpop.trf.xlu0
        %v351 = vpop.trf.xlu0
        %v352 = vpop.trf.xlu0
        %v353 = vpop.trf.xlu0
        %v354 = vpop.trf.xlu0
        %v355 = vpop.trf.xlu0
        %356 = vxpose.xlu0.c.b16.start [1/8] %v283, 128
        %357 = vxpose.xlu0.c.b16.cont [2/8] 0, 128
        %358 = vxpose.xlu0.c.b16.cont [3/8] 0, 128
        %359 = vxpose.xlu0.c.b16.cont [4/8] 0, 128
        %360 = vxpose.xlu0.c.b16.cont [5/8] 0, 128
        %361 = vxpose.xlu0.c.b16.cont [6/8] 0, 128
        %362 = vxpose.xlu0.c.b16.cont [7/8] 0, 128
        %363 = vxpose.xlu0.c.b16.end [8/8] 0, 128
        %v364 = vpop.trf.xlu0
        %v365 = vpop.trf.xlu0
        %v366 = vpop.trf.xlu0
        %v367 = vpop.trf.xlu0
        %v368 = vpop.trf.xlu0
        %v369 = vpop.trf.xlu0
        %v370 = vpop.trf.xlu0
        %v371 = vpop.trf.xlu0
        %v373 = vsel %vm291, %v348, 0
        %v376 = vsel %vm291, %v349, 0
        %v379 = vsel %vm291, %v350, 0
        %v382 = vsel %vm291, %v351, 0
        %v385 = vsel %vm291, %v352, 0
        %v388 = vsel %vm291, %v353, 0
        %v391 = vsel %vm291, %v354, 0
        %v394 = vsel %vm291, %v355, 0
        %v397 = vsel %vm291, %v364, 0
        %v400 = vsel %vm291, %v365, 0
        %v403 = vsel %vm291, %v366, 0
        %v406 = vsel %vm291, %v367, 0
        %v409 = vsel %vm291, %v368, 0
        %v412 = vsel %vm291, %v369, 0
        %v415 = vsel %vm291, %v370, 0
        %v418 = vsel %vm291, %v371, 0
        %420 = vmatprep.subr.bf16.mxu0 %v339
        %421 = vmatpush1.bf16.msra.mxu0 %v338
        %422 = vmatprep.subr.bf16.mxu0 0
        %423 = vmatpush1.bf16.msra.mxu0 0
        %424 = vmatprep.subr.bf16.mxu0 0
        %425 = vmatpush1.bf16.msra.mxu0 0
        %426 = vmatprep.subr.bf16.mxu0 0
        %427 = vmatpush1.bf16.msra.mxu0 0
        %428 = vmatprep.subr.bf16.mxu0 0
        %429 = vmatpush1.bf16.msra.mxu0 0
        %430 = vmatprep.subr.bf16.mxu0 0
        %431 = vmatpush1.bf16.msra.mxu0 0
        %432 = vmatprep.subr.bf16.mxu0 0
        %433 = vmatpush1.bf16.msra.mxu0 0
        %434 = vmatprep.subr.bf16.mxu0 0
        %435 = vmatpush1.bf16.msra.mxu0 0
        %436 = vmatprep.subr.bf16.mxu0 0
        %437 = vmatpush1.bf16.msra.mxu0 0
        %438 = vmatprep.subr.bf16.mxu0 0
        %439 = vmatpush1.bf16.msra.mxu0 0
        %440 = vmatprep.subr.bf16.mxu0 0
        %441 = vmatpush1.bf16.msra.mxu0 0
        %442 = vmatprep.subr.bf16.mxu0 0
        %443 = vmatpush1.bf16.msra.mxu0 0
        %444 = vmatprep.subr.bf16.mxu0 0
        %445 = vmatpush1.bf16.msra.mxu0 0
        %446 = vmatprep.subr.bf16.mxu0 0
        %447 = vmatpush1.bf16.msra.mxu0 0
        %448 = vmatprep.subr.bf16.mxu0 0
        %449 = vmatpush1.bf16.msra.mxu0 0
        %450 = vmatprep.subr.bf16.mxu0 0
        %451 = vmatpush1.bf16.msra.mxu0 0
        %452 = vmatprep.mubr.bf16.mxu0 0
        %453 = vmatmul.mubr.bf16.gmra.mrb[0].mxu0 %v373
        %v454 = vpop.f32.mrb[0].mxu0
        %v455 = vadd.f32 0.0, %v454
        %v456 = vpop.f32.mrb[0].mxu0
        %v457 = vadd.f32 0.0, %v456
        %v458 = vpop.f32.mrb[0].mxu0
        %v459 = vadd.f32 0.0, %v458
        %v460 = vpop.f32.mrb[0].mxu0
        %v461 = vadd.f32 0.0, %v460
        %462 = vmatprep.mubr.bf16.mxu0 0
        %463 = vmatmul.mubr.bf16.gmra.mrb[0].mxu0 %v376
        %v464 = vpop.f32.mrb[0].mxu0
        %v465 = vadd.f32 0.0, %v464
        %v466 = vpop.f32.mrb[0].mxu0
        %v467 = vadd.f32 0.0, %v466
        %v468 = vpop.f32.mrb[0].mxu0
        %v469 = vadd.f32 0.0, %v468
        %v470 = vpop.f32.mrb[0].mxu0
        %v471 = vadd.f32 0.0, %v470
        %472 = vmatprep.mubr.bf16.mxu0 0
        %473 = vmatmul.mubr.bf16.gmra.mrb[0].mxu0 %v379
        %v474 = vpop.f32.mrb[0].mxu0
        %v475 = vadd.f32 0.0, %v474
        %v476 = vpop.f32.mrb[0].mxu0
        %v477 = vadd.f32 0.0, %v476
        %v478 = vpop.f32.mrb[0].mxu0
        %v479 = vadd.f32 0.0, %v478
        %v480 = vpop.f32.mrb[0].mxu0
        %v481 = vadd.f32 0.0, %v480
        %482 = vmatprep.mubr.bf16.mxu0 0
        %483 = vmatmul.mubr.bf16.gmra.mrb[0].mxu0 %v382
        %v484 = vpop.f32.mrb[0].mxu0
        %v485 = vadd.f32 0.0, %v484
        %v486 = vpop.f32.mrb[0].mxu0
        %v487 = vadd.f32 0.0, %v486
        %v488 = vpop.f32.mrb[0].mxu0
        %v489 = vadd.f32 0.0, %v488
        %v490 = vpop.f32.mrb[0].mxu0
        %v491 = vadd.f32 0.0, %v490
        %492 = vmatprep.mubr.bf16.mxu0 0
        %493 = vmatmul.mubr.bf16.gmra.mrb[0].mxu0 %v385
        %v494 = vpop.f32.mrb[0].mxu0
        %v495 = vadd.f32 0.0, %v494
        %v496 = vpop.f32.mrb[0].mxu0
        %v497 = vadd.f32 0.0, %v496
        %v498 = vpop.f32.mrb[0].mxu0
        %v499 = vadd.f32 0.0, %v498
        %v500 = vpop.f32.mrb[0].mxu0
        %v501 = vadd.f32 0.0, %v500
        %502 = vmatprep.mubr.bf16.mxu0 0
        %503 = vmatmul.mubr.bf16.gmra.mrb[0].mxu0 %v388
        %v504 = vpop.f32.mrb[0].mxu0
        %v505 = vadd.f32 0.0, %v504
        %v506 = vpop.f32.mrb[0].mxu0
        %v507 = vadd.f32 0.0, %v506
        %v508 = vpop.f32.mrb[0].mxu0
        %v509 = vadd.f32 0.0, %v508
        %v510 = vpop.f32.mrb[0].mxu0
        %v511 = vadd.f32 0.0, %v510
        %512 = vmatprep.mubr.bf16.mxu0 0
        %513 = vmatmul.mubr.bf16.gmra.mrb[0].mxu0 %v391
        %v514 = vpop.f32.mrb[0].mxu0
        %v515 = vadd.f32 0.0, %v514
        %v516 = vpop.f32.mrb[0].mxu0
        %v517 = vadd.f32 0.0, %v516
        %v518 = vpop.f32.mrb[0].mxu0
        %v519 = vadd.f32 0.0, %v518
        %v520 = vpop.f32.mrb[0].mxu0
        %v521 = vadd.f32 0.0, %v520
        %522 = vmatprep.mubr.bf16.mxu0 0
        %523 = vmatmul.mubr.bf16.gmra.mrb[0].mxu0 %v394
        %v524 = vpop.f32.mrb[0].mxu0
        %v525 = vadd.f32 0.0, %v524
        %v526 = vpop.f32.mrb[0].mxu0
        %v527 = vadd.f32 0.0, %v526
        %v528 = vpop.f32.mrb[0].mxu0
        %v529 = vadd.f32 0.0, %v528
        %v530 = vpop.f32.mrb[0].mxu0
        %v531 = vadd.f32 0.0, %v530
        %532 = vmatprep.mubr.bf16.mxu0 0
        %533 = vmatmul.mubr.bf16.gmra.mrb[0].mxu0 %v397
        %v534 = vpop.f32.mrb[0].mxu0
        %v535 = vadd.f32 0.0, %v534
        %v536 = vpop.f32.mrb[0].mxu0
        %v537 = vadd.f32 0.0, %v536
        %v538 = vpop.f32.mrb[0].mxu0
        %v539 = vadd.f32 0.0, %v538
        %v540 = vpop.f32.mrb[0].mxu0
        %v541 = vadd.f32 0.0, %v540
        %542 = vmatprep.mubr.bf16.mxu0 0
        %543 = vmatmul.mubr.bf16.gmra.mrb[0].mxu0 %v400
        %v544 = vpop.f32.mrb[0].mxu0
        %v545 = vadd.f32 0.0, %v544
        %v546 = vpop.f32.mrb[0].mxu0
        %v547 = vadd.f32 0.0, %v546
        %v548 = vpop.f32.mrb[0].mxu0
        %v549 = vadd.f32 0.0, %v548
        %v550 = vpop.f32.mrb[0].mxu0
        %v551 = vadd.f32 0.0, %v550
        %552 = vmatprep.mubr.bf16.mxu0 0
        %553 = vmatmul.mubr.bf16.gmra.mrb[0].mxu0 %v403
        %v554 = vpop.f32.mrb[0].mxu0
        %v555 = vadd.f32 0.0, %v554
        %v556 = vpop.f32.mrb[0].mxu0
        %v557 = vadd.f32 0.0, %v556
        %v558 = vpop.f32.mrb[0].mxu0
        %v559 = vadd.f32 0.0, %v558
        %v560 = vpop.f32.mrb[0].mxu0
        %v561 = vadd.f32 0.0, %v560
        %562 = vmatprep.mubr.bf16.mxu0 0
        %563 = vmatmul.mubr.bf16.gmra.mrb[0].mxu0 %v406
        %v564 = vpop.f32.mrb[0].mxu0
        %v565 = vadd.f32 0.0, %v564
        %v566 = vpop.f32.mrb[0].mxu0
        %v567 = vadd.f32 0.0, %v566
        %v568 = vpop.f32.mrb[0].mxu0
        %v569 = vadd.f32 0.0, %v568
        %v570 = vpop.f32.mrb[0].mxu0
        %v571 = vadd.f32 0.0, %v570
        %572 = vmatprep.mubr.bf16.mxu0 0
        %573 = vmatmul.mubr.bf16.gmra.mrb[0].mxu0 %v409
        %v574 = vpop.f32.mrb[0].mxu0
        %v575 = vadd.f32 0.0, %v574
        %v576 = vpop.f32.mrb[0].mxu0
        %v577 = vadd.f32 0.0, %v576
        %v578 = vpop.f32.mrb[0].mxu0
        %v579 = vadd.f32 0.0, %v578
        %v580 = vpop.f32.mrb[0].mxu0
        %v581 = vadd.f32 0.0, %v580
        %582 = vmatprep.mubr.bf16.mxu0 0
        %583 = vmatmul.mubr.bf16.gmra.mrb[0].mxu0 %v412
        %v584 = vpop.f32.mrb[0].mxu0
        %v585 = vadd.f32 0.0, %v584
        %v586 = vpop.f32.mrb[0].mxu0
        %v587 = vadd.f32 0.0, %v586
        %v588 = vpop.f32.mrb[0].mxu0
        %v589 = vadd.f32 0.0, %v588
        %v590 = vpop.f32.mrb[0].mxu0
        %v591 = vadd.f32 0.0, %v590
        %592 = vmatprep.mubr.bf16.mxu0 0
        %593 = vmatmul.mubr.bf16.gmra.mrb[0].mxu0 %v415
        %v594 = vpop.f32.mrb[0].mxu0
        %v595 = vadd.f32 0.0, %v594
        %v596 = vpop.f32.mrb[0].mxu0
        %v597 = vadd.f32 0.0, %v596
        %v598 = vpop.f32.mrb[0].mxu0
        %v599 = vadd.f32 0.0, %v598
        %v600 = vpop.f32.mrb[0].mxu0
        %v601 = vadd.f32 0.0, %v600
        %602 = vmatprep.mubr.bf16.mxu0 0
        %603 = vmatmul.mubr.bf16.gmra.mrb[0].mxu0 %v418
        %v604 = vpop.f32.mrb[0].mxu0
        %v605 = vadd.f32 0.0, %v604
        %v606 = vpop.f32.mrb[0].mxu0
        %v607 = vadd.f32 0.0, %v606
        %v608 = vpop.f32.mrb[0].mxu0
        %v609 = vadd.f32 0.0, %v608
        %v610 = vpop.f32.mrb[0].mxu0
        %v611 = vadd.f32 0.0, %v610
        %612 = vdwg.mxu0
        %v613 = vmax.f32 %v455, %v465
        %v614 = vmax.f32 %v459, %v469
        %v615 = vmax.f32 %v613, %v475
        %v616 = vmax.f32 %v614, %v479
        %v617 = vmax.f32 %v615, %v485
        %v618 = vmax.f32 %v616, %v489
        %v619 = vmax.f32 %v617, %v495
        %v620 = vmax.f32 %v618, %v499
        %v621 = vmax.f32 %v619, %v505
        %v622 = vmax.f32 %v620, %v509
        %v623 = vmax.f32 %v621, %v515
        %v624 = vmax.f32 %v622, %v519
        %v625 = vmax.f32 %v623, %v525
        %v626 = vmax.f32 %v624, %v529
        %v627 = vmax.f32 %v625, %v535
        %v628 = vmax.f32 %v626, %v539
        %v629 = vmax.f32 %v627, %v545
        %v630 = vmax.f32 %v628, %v549
        %v631 = vmax.f32 %v629, %v555
        %v632 = vmax.f32 %v630, %v559
        %v633 = vmax.f32 %v631, %v565
        %v634 = vmax.f32 %v632, %v569
        %v635 = vmax.f32 %v633, %v575
        %v636 = vmax.f32 %v634, %v579
        %v637 = vmax.f32 %v635, %v585
        %v638 = vmax.f32 %v636, %v589
        %v639 = vmax.f32 %v637, %v595
        %v640 = vmax.f32 %v638, %v599
        %v641 = vmax.f32 %v639, %v605
        %v642 = vmax.f32 %v640, %v609
        %v643 = vmax.f32 %v641, %v642
        %v644 = vrot.slane %v643, 4
        %v645 = vmax.f32 %v643, %v644
        %v646 = vrot.slane %v645, 2
        %v647 = vmax.f32 %v645, %v646
        %v648 = vrot.slane %v647, 1
        %v649 = vmax.f32 %v647, %v648
        %v650 = vmax.f32 %v457, %v467
        %v651 = vmax.f32 %v461, %v471
        %v652 = vmax.f32 %v650, %v477
        %v653 = vmax.f32 %v651, %v481
        %v654 = vmax.f32 %v652, %v487
        %v655 = vmax.f32 %v653, %v491
        %v656 = vmax.f32 %v654, %v497
        %v657 = vmax.f32 %v655, %v501
        %v658 = vmax.f32 %v656, %v507
        %v659 = vmax.f32 %v657, %v511
        %v660 = vmax.f32 %v658, %v517
        %v661 = vmax.f32 %v659, %v521
        %v662 = vmax.f32 %v660, %v527
        %v663 = vmax.f32 %v661, %v531
        %v664 = vmax.f32 %v662, %v537
        %v665 = vmax.f32 %v663, %v541
        %v666 = vmax.f32 %v664, %v547
        %v667 = vmax.f32 %v665, %v551
        %v668 = vmax.f32 %v666, %v557
        %v669 = vmax.f32 %v667, %v561
        %v670 = vmax.f32 %v668, %v567
        %v671 = vmax.f32 %v669, %v571
        %v672 = vmax.f32 %v670, %v577
        %v673 = vmax.f32 %v671, %v581
        %v674 = vmax.f32 %v672, %v587
        %v675 = vmax.f32 %v673, %v591
        %v676 = vmax.f32 %v674, %v597
        %v677 = vmax.f32 %v675, %v601
        %v678 = vmax.f32 %v676, %v607
        %v679 = vmax.f32 %v677, %v611
        %v680 = vmax.f32 %v678, %v679
        %v681 = vrot.slane %v680, 4
        %v682 = vmax.f32 %v680, %v681
        %v683 = vrot.slane %v682, 2
        %v684 = vmax.f32 %v682, %v683
        %v685 = vrot.slane %v684, 1
        %v686 = vmax.f32 %v684, %v685
        %v687 = vsub.f32 %v455, %v649
        %v688 = vsub.f32 %v457, %v686
        %v689 = vsub.f32 %v459, %v649
        %v690 = vsub.f32 %v461, %v686
        %v691 = vsub.f32 %v465, %v649
        %v692 = vsub.f32 %v467, %v686
        %v693 = vsub.f32 %v469, %v649
        %v694 = vsub.f32 %v471, %v686
        %v695 = vsub.f32 %v475, %v649
        %v696 = vsub.f32 %v477, %v686
        %v697 = vsub.f32 %v479, %v649
        %v698 = vsub.f32 %v481, %v686
        %v699 = vsub.f32 %v485, %v649
        %v700 = vsub.f32 %v487, %v686
        %v701 = vsub.f32 %v489, %v649
        %v702 = vsub.f32 %v491, %v686
        %v703 = vsub.f32 %v495, %v649
        %v704 = vsub.f32 %v497, %v686
        %v705 = vsub.f32 %v499, %v649
        %v706 = vsub.f32 %v501, %v686
        %v707 = vsub.f32 %v505, %v649
        %v708 = vsub.f32 %v507, %v686
        %v709 = vsub.f32 %v509, %v649
        %v710 = vsub.f32 %v511, %v686
        %v711 = vsub.f32 %v515, %v649
        %v712 = vsub.f32 %v517, %v686
        %v713 = vsub.f32 %v519, %v649
        %v714 = vsub.f32 %v521, %v686
        %v715 = vsub.f32 %v525, %v649
        %v716 = vsub.f32 %v527, %v686
        %v717 = vsub.f32 %v529, %v649
        %v718 = vsub.f32 %v531, %v686
        %v719 = vsub.f32 %v535, %v649
        %v720 = vsub.f32 %v537, %v686
        %v721 = vsub.f32 %v539, %v649
        %v722 = vsub.f32 %v541, %v686
        %v723 = vsub.f32 %v545, %v649
        %v724 = vsub.f32 %v547, %v686
        %v725 = vsub.f32 %v549, %v649
        %v726 = vsub.f32 %v551, %v686
        %v727 = vsub.f32 %v555, %v649
        %v728 = vsub.f32 %v557, %v686
        %v729 = vsub.f32 %v559, %v649
        %v730 = vsub.f32 %v561, %v686
        %v731 = vsub.f32 %v565, %v649
        %v732 = vsub.f32 %v567, %v686
        %v733 = vsub.f32 %v569, %v649
        %v734 = vsub.f32 %v571, %v686
        %v735 = vsub.f32 %v575, %v649
        %v736 = vsub.f32 %v577, %v686
        %v737 = vsub.f32 %v579, %v649
        %v738 = vsub.f32 %v581, %v686
        %v739 = vsub.f32 %v585, %v649
        %v740 = vsub.f32 %v587, %v686
        %v741 = vsub.f32 %v589, %v649
        %v742 = vsub.f32 %v591, %v686
        %v743 = vsub.f32 %v595, %v649
        %v744 = vsub.f32 %v597, %v686
        %v745 = vsub.f32 %v599, %v649
        %v746 = vsub.f32 %v601, %v686
        %v747 = vsub.f32 %v605, %v649
        %v748 = vsub.f32 %v607, %v686
        %v749 = vsub.f32 %v609, %v649
        %v750 = vsub.f32 %v611, %v686
        %v751 = vmul.f32 %v687, 1.442695
        %v752 = vpow.pop %v751
        %v753 = vmul.f32 %v688, 1.442695
        %v754 = vpow.pop %v753
        %v755 = vmul.f32 %v689, 1.442695
        %v756 = vpow.pop %v755
        %v757 = vmul.f32 %v690, 1.442695
        %v758 = vpow.pop %v757
        %v759 = vmul.f32 %v691, 1.442695
        %v760 = vpow.pop %v759
        %v761 = vmul.f32 %v692, 1.442695
        %v762 = vpow.pop %v761
        %v763 = vmul.f32 %v693, 1.442695
        %v764 = vpow.pop %v763
        %v765 = vmul.f32 %v694, 1.442695
        %v766 = vpow.pop %v765
        %v767 = vmul.f32 %v695, 1.442695
        %v768 = vpow.pop %v767
        %v769 = vmul.f32 %v696, 1.442695
        %v770 = vpow.pop %v769
        %v771 = vmul.f32 %v697, 1.442695
        %v772 = vpow.pop %v771
        %v773 = vmul.f32 %v698, 1.442695
        %v774 = vpow.pop %v773
        %v775 = vmul.f32 %v699, 1.442695
        %v776 = vpow.pop %v775
        %v777 = vmul.f32 %v700, 1.442695
        %v778 = vpow.pop %v777
        %v779 = vmul.f32 %v701, 1.442695
        %v780 = vpow.pop %v779
        %v781 = vmul.f32 %v702, 1.442695
        %v782 = vpow.pop %v781
        %v783 = vmul.f32 %v703, 1.442695
        %v784 = vpow.pop %v783
        %v785 = vmul.f32 %v704, 1.442695
        %v786 = vpow.pop %v785
        %v787 = vmul.f32 %v705, 1.442695
        %v788 = vpow.pop %v787
        %v789 = vmul.f32 %v706, 1.442695
        %v790 = vpow.pop %v789
        %v791 = vmul.f32 %v707, 1.442695
        %v792 = vpow.pop %v791
        %v793 = vmul.f32 %v708, 1.442695
        %v794 = vpow.pop %v793
        %v795 = vmul.f32 %v709, 1.442695
        %v796 = vpow.pop %v795
        %v797 = vmul.f32 %v710, 1.442695
        %v798 = vpow.pop %v797
        %v799 = vmul.f32 %v711, 1.442695
        %v800 = vpow.pop %v799
        %v801 = vmul.f32 %v712, 1.442695
        %v802 = vpow.pop %v801
        %v803 = vmul.f32 %v713, 1.442695
        %v804 = vpow.pop %v803
        %v805 = vmul.f32 %v714, 1.442695
        %v806 = vpow.pop %v805
        %v807 = vmul.f32 %v715, 1.442695
        %v808 = vpow.pop %v807
        %v809 = vmul.f32 %v716, 1.442695
        %v810 = vpow.pop %v809
        %v811 = vmul.f32 %v717, 1.442695
        %v812 = vpow.pop %v811
        %v813 = vmul.f32 %v718, 1.442695
        %v814 = vpow.pop %v813
        %v815 = vmul.f32 %v719, 1.442695
        %v816 = vpow.pop %v815
        %v817 = vmul.f32 %v720, 1.442695
        %v818 = vpow.pop %v817
        %v819 = vmul.f32 %v721, 1.442695
        %v820 = vpow.pop %v819
        %v821 = vmul.f32 %v722, 1.442695
        %v822 = vpow.pop %v821
        %v823 = vmul.f32 %v723, 1.442695
        %v824 = vpow.pop %v823
        %v825 = vmul.f32 %v724, 1.442695
        %v826 = vpow.pop %v825
        %v827 = vmul.f32 %v725, 1.442695
        %v828 = vpow.pop %v827
        %v829 = vmul.f32 %v726, 1.442695
        %v830 = vpow.pop %v829
        %v831 = vmul.f32 %v727, 1.442695
        %v832 = vpow.pop %v831
        %v833 = vmul.f32 %v728, 1.442695
        %v834 = vpow.pop %v833
        %v835 = vmul.f32 %v729, 1.442695
        %v836 = vpow.pop %v835
        %v837 = vmul.f32 %v730, 1.442695
        %v838 = vpow.pop %v837
        %v839 = vmul.f32 %v731, 1.442695
        %v840 = vpow.pop %v839
        %v841 = vmul.f32 %v732, 1.442695
        %v842 = vpow.pop %v841
        %v843 = vmul.f32 %v733, 1.442695
        %v844 = vpow.pop %v843
        %v845 = vmul.f32 %v734, 1.442695
        %v846 = vpow.pop %v845
        %v847 = vmul.f32 %v735, 1.442695
        %v848 = vpow.pop %v847
        %v849 = vmul.f32 %v736, 1.442695
        %v850 = vpow.pop %v849
        %v851 = vmul.f32 %v737, 1.442695
        %v852 = vpow.pop %v851
        %v853 = vmul.f32 %v738, 1.442695
        %v854 = vpow.pop %v853
        %v855 = vmul.f32 %v739, 1.442695
        %v856 = vpow.pop %v855
        %v857 = vmul.f32 %v740, 1.442695
        %v858 = vpow.pop %v857
        %v859 = vmul.f32 %v741, 1.442695
        %v860 = vpow.pop %v859
        %v861 = vmul.f32 %v742, 1.442695
        %v862 = vpow.pop %v861
        %v863 = vmul.f32 %v743, 1.442695
        %v864 = vpow.pop %v863
        %v865 = vmul.f32 %v744, 1.442695
        %v866 = vpow.pop %v865
        %v867 = vmul.f32 %v745, 1.442695
        %v868 = vpow.pop %v867
        %v869 = vmul.f32 %v746, 1.442695
        %v870 = vpow.pop %v869
        %v871 = vmul.f32 %v747, 1.442695
        %v872 = vpow.pop %v871
        %v873 = vmul.f32 %v748, 1.442695
        %v874 = vpow.pop %v873
        %v875 = vmul.f32 %v749, 1.442695
        %v876 = vpow.pop %v875
        %v877 = vmul.f32 %v750, 1.442695
        %v878 = vpow.pop %v877
        %v879 = vpack.c.bf16 %v756, %v752
        %v880 = vpack.c.bf16 %v758, %v754
        %v881 = vpack.c.bf16 %v764, %v760
        %v882 = vpack.c.bf16 %v766, %v762
        %v883 = vpack.c.bf16 %v772, %v768
        %v884 = vpack.c.bf16 %v774, %v770
        %v885 = vpack.c.bf16 %v780, %v776
        %v886 = vpack.c.bf16 %v782, %v778
        %v887 = vpack.c.bf16 %v788, %v784
        %v888 = vpack.c.bf16 %v790, %v786
        %v889 = vpack.c.bf16 %v796, %v792
        %v890 = vpack.c.bf16 %v798, %v794
        %v891 = vpack.c.bf16 %v804, %v800
        %v892 = vpack.c.bf16 %v806, %v802
        %v893 = vpack.c.bf16 %v812, %v808
        %v894 = vpack.c.bf16 %v814, %v810
        %v895 = vpack.c.bf16 %v820, %v816
        %v896 = vpack.c.bf16 %v822, %v818
        %v897 = vpack.c.bf16 %v828, %v824
        %v898 = vpack.c.bf16 %v830, %v826
        %v899 = vpack.c.bf16 %v836, %v832
        %v900 = vpack.c.bf16 %v838, %v834
        %v901 = vpack.c.bf16 %v844, %v840
        %v902 = vpack.c.bf16 %v846, %v842
        %v903 = vpack.c.bf16 %v852, %v848
        %v904 = vpack.c.bf16 %v854, %v850
        %v905 = vpack.c.bf16 %v860, %v856
        %v906 = vpack.c.bf16 %v862, %v858
        %v907 = vpack.c.bf16 %v868, %v864
        %v908 = vpack.c.bf16 %v870, %v866
        %v909 = vpack.c.bf16 %v876, %v872
        %v910 = vpack.c.bf16 %v878, %v874
        %v911 = vld [vmem:[%s3] sm:$0xf]
        %v912 = vld [vmem:[%s3 + $0x4] sm:$0xf]
        %v915 = vunpack.c.l.b16 %v911
        %v916 = vunpack.c.l.b16 %v912
        %v917 = vpack.c.b16 %v916, %v915
        %v919 = vsel %vm291, %v917, 0
        %921 = vmatprep.subr.bf16.mxu0 %v283
        %922 = vmatpush1.bf16.msra.mxu0 %v282
        %923 = vmatprep.subr.bf16.mxu0 0
        %924 = vmatpush1.bf16.msra.mxu0 0
        %925 = vmatprep.subr.bf16.mxu0 0
        %926 = vmatpush1.bf16.msra.mxu0 0
        %927 = vmatprep.subr.bf16.mxu0 0
        %928 = vmatpush1.bf16.msra.mxu0 0
        %929 = vmatprep.subr.bf16.mxu0 0
        %930 = vmatpush1.bf16.msra.mxu0 0
        %931 = vmatprep.subr.bf16.mxu0 0
        %932 = vmatpush1.bf16.msra.mxu0 0
        %933 = vmatprep.subr.bf16.mxu0 0
        %934 = vmatpush1.bf16.msra.mxu0 0
        %935 = vmatprep.subr.bf16.mxu0 0
        %936 = vmatpush1.bf16.msra.mxu0 0
        %937 = vmatprep.subr.bf16.mxu0 0
        %938 = vmatpush1.bf16.msra.mxu0 0
        %939 = vmatprep.subr.bf16.mxu0 0
        %940 = vmatpush1.bf16.msra.mxu0 0
        %941 = vmatprep.subr.bf16.mxu0 0
        %942 = vmatpush1.bf16.msra.mxu0 0
        %943 = vmatprep.subr.bf16.mxu0 0
        %944 = vmatpush1.bf16.msra.mxu0 0
        %945 = vmatprep.subr.bf16.mxu0 0
        %946 = vmatpush1.bf16.msra.mxu0 0
        %947 = vmatprep.subr.bf16.mxu0 0
        %948 = vmatpush1.bf16.msra.mxu0 0
        %949 = vmatprep.subr.bf16.mxu0 0
        %950 = vmatpush1.bf16.msra.mxu0 0
        %951 = vmatprep.subr.bf16.mxu0 0
        %952 = vmatpush1.bf16.msra.mxu0 0
        %953 = vmatprep.mubr.bf16.mxu0 0
        %954 = vmatmul.mubr.bf16.gmra.mrb[0].mxu0 %v919
        %v955 = vpop.f32.mrb[0].mxu0
        %v956 = vadd.f32 0.0, %v955
        %v957 = vpop.f32.mrb[0].mxu0
        %v958 = vadd.f32 0.0, %v957
        %v959 = vpop.f32.mrb[0].mxu0
        %v960 = vadd.f32 0.0, %v959
        %v961 = vpop.f32.mrb[0].mxu0
        %v962 = vadd.f32 0.0, %v961
        %963 = vdwg.mxu0
        %v964 = vpack.c.bf16 %v960, %v956
        %v965 = vpack.c.bf16 %v962, %v958
        %966 = vmatprep.subr.bf16.mxu0 %v880
        %967 = vmatpush1.bf16.msra.mxu0 %v879
        %968 = vmatprep.subr.bf16.mxu0 %v882
        %969 = vmatpush1.bf16.msra.mxu0 %v881
        %970 = vmatprep.subr.bf16.mxu0 %v884
        %971 = vmatpush1.bf16.msra.mxu0 %v883
        %972 = vmatprep.subr.bf16.mxu0 %v886
        %973 = vmatpush1.bf16.msra.mxu0 %v885
        %974 = vmatprep.subr.bf16.mxu0 %v888
        %975 = vmatpush1.bf16.msra.mxu0 %v887
        %976 = vmatprep.subr.bf16.mxu0 %v890
        %977 = vmatpush1.bf16.msra.mxu0 %v889
        %978 = vmatprep.subr.bf16.mxu0 %v892
        %979 = vmatpush1.bf16.msra.mxu0 %v891
        %980 = vmatprep.subr.bf16.mxu0 %v894
        %981 = vmatpush1.bf16.msra.mxu0 %v893
        %982 = vmatprep.subr.bf16.mxu0 %v896
        %983 = vmatpush1.bf16.msra.mxu0 %v895
        %984 = vmatprep.subr.bf16.mxu0 %v898
        %985 = vmatpush1.bf16.msra.mxu0 %v897
        %986 = vmatprep.subr.bf16.mxu0 %v900
        %987 = vmatpush1.bf16.msra.mxu0 %v899
        %988 = vmatprep.subr.bf16.mxu0 %v902
        %989 = vmatpush1.bf16.msra.mxu0 %v901
        %990 = vmatprep.subr.bf16.mxu0 %v904
        %991 = vmatpush1.bf16.msra.mxu0 %v903
        %992 = vmatprep.subr.bf16.mxu0 %v906
        %993 = vmatpush1.bf16.msra.mxu0 %v905
        %994 = vmatprep.subr.bf16.mxu0 %v908
        %995 = vmatpush1.bf16.msra.mxu0 %v907
        %996 = vmatprep.subr.bf16.mxu0 %v910
        %997 = vmatpush1.bf16.msra.mxu0 %v909
        %998 = vmatprep.mubr.bf16.mxu0 %v965
        %999 = vmatmul.mubr.bf16.gmra.mrb[0].mxu0 %v964
        %v1000 = vpop.f32.mrb[0].mxu0
        %v1001 = vadd.f32 0.0, %v1000
        %v1002 = vpop.f32.mrb[0].mxu0
        %v1003 = vadd.f32 0.0, %v1002
        %v1004 = vpop.f32.mrb[0].mxu0
        %v1005 = vadd.f32 0.0, %v1004
        %v1006 = vpop.f32.mrb[0].mxu0
        %v1007 = vadd.f32 0.0, %v1006
        %1008 = vmatprep.mubr.bf16.mxu0 1065369472
        %1009 = vmatmul.mubr.bf16.gmra.mrb[0].mxu0 1065369472
        %v1010 = vpop.f32.mrb[0].mxu0
        %v1011 = vadd.f32 0.0, %v1010
        %v1012 = vpop.f32.mrb[0].mxu0
        %v1013 = vadd.f32 0.0, %v1012
        %v1014 = vpop.f32.mrb[0].mxu0
        %v1015 = vpop.f32.mrb[0].mxu0
        %1016 = vdwg.mxu0
        %v1017 = vrcp.pop %v1011
        %v1018 = vrcp.pop %v1013
        %v1019 = vlaneseq
        %v1020 = vshrl.u32 %v1019, 7
        %v1021 = vsub.s32 0, %v1020
        %v1022 = vrot.slane %v1017, %v1021
        %v1023 = vlaneseq
        %v1024 = vshrl.u32 %v1023, 7
        %v1025 = vsub.s32 0, %v1024
        %v1026 = vrot.slane %v1018, %v1025
        %v1027 = vmul.f32 %v1001, %v1022
        %v1028 = vmul.f32 %v1003, %v1026
        %v1029 = vmul.f32 %v1005, %v1022
        %v1030 = vmul.f32 %v1007, %v1026
        %1031 = vst [vmem:[%s269] sm:$0xff] %v1027
        %1032 = vst [vmem:[%s269 + $0x8] sm:$0xff] %v1028
        %1033 = vst [vmem:[%s269 + $0x10] sm:$0xff] %v1029
        %1034 = vst [vmem:[%s269 + $0x18] sm:$0xff] %v1030
        %s1035 = sand.u32 %s126, 1
        %s1036 = scalar_lea.sflag [#allocation4], %s1035
        %s1037 = sand.u32 %s126, 1
        %s1038 = smul.addr %s1037, 32
        %s1039 = scalar_lea.vmem [#allocation8], %s1038
        // Predicated region
        $region49: #{tpu_custom_call.1} parent=35 // pred_check
          %p1040 = pneg %p136
        $region50: #{tpu_custom_call.1} parent=35 // pred_check_branch
          %1042 = sbr.rel (%p1040) target = $region52
        $region51: #{tpu_custom_call.1} parent=35 // pred_region
          %s1044 = ssub.s32 512, 512
          %1045 = vsyncadd %s1036, %s1044
          %s1046 = smul.addr %s24, 4
          %s1047 = smul.addr %s1046, 128
          %s1048 = scalar_lea.hbm %s4, %s1047
          %s1049 = sshll.u32 %s1039, 4
          %s1050 = int_to_ptr.vmem [resolvable:$true] %s1049
          %1055 = dma.vmem_to_hbm [thread:$0]  %s1050, 512, %s1048, %s1036, 256, 256, 16
        $region52: #{tpu_custom_call.1} parent=35 // pred_fallthru
          _
      $region36: #{tpu_custom_call.1} parent=5 // pred_fallthru
        _
      %p1056 = scmp.le.s32.totalorder 2, %s19
      // Predicated region
      $region53: #{tpu_custom_call.1} parent=5 // pred_check
        %p1057 = pneg %p1056
      $region54: #{tpu_custom_call.1} parent=5 // pred_check_branch
        %1059 = sbr.rel (%p1057) target = $region56
      $region55: #{tpu_custom_call.1} parent=5 // pred_region
        %s1060 = ssub.s32 %s19, 2
        // Predicated region
        $region57: #{tpu_custom_call.1} parent=55 // pred_check
          %p1061 = pneg %p142
        $region58: #{tpu_custom_call.1} parent=55 // pred_check_branch
          %1063 = sbr.rel (%p1061) target = $region60
        $region59: #{tpu_custom_call.1} parent=55 // pred_region
          %s1064 = sand.u32 %s127, 1
          %s1065 = scalar_lea.sflag [#allocation4], %s1064
          %s1066 = sand.u32 %s127, 1
          %s1067 = smul.addr %s1066, 32
          %s1068 = scalar_lea.vmem [#allocation8], %s1067
          %1069 = dma.done %s1065, 512
        $region60: #{tpu_custom_call.1} parent=55 // pred_fallthru
          _
      $region56: #{tpu_custom_call.1} parent=5 // pred_fallthru
        _
    $region6: #{tpu_custom_call.1} parent=1 // loop_footer
      %s23 = sadd.s32 1, %s19
    $region7: #{tpu_custom_call.1} parent=1 // loop_footer_branch
      %18 = sbr.rel target = $region3
    $region8: #{tpu_custom_call.1} parent=1 // loop_exit
      _
    %1070 = vsyncpa [#allocation3], 1
    %s1071 = scalar_lea.sflag [#allocation3], 1
    %1072 = vsyncpa %s1071, 1
    %1073 = vsyncpa [#allocation6], 1
    %s1074 = scalar_lea.sflag [#allocation6], 1
    %1075 = vsyncpa %s1074, 1
    %1076 = vsyncpa [#allocation4], 1
    %s1077 = scalar_lea.sflag [#allocation4], 1
    %1078 = vsyncpa %s1077, 1

</llo_original>
